<compile_context>
chip_gen: v7x
topology: tpu7x:2x2x1
jax: 0.10.0
libtpu: 0.0.40
codegen_flags: <defaults>
</compile_context>

<pallas_src>
import jax
import jax.numpy as jnp
from jax.experimental import pallas as pl
from jax.experimental.pallas import tpu as pltpu


def _linear_kernel(x_ref, w_ref, b_ref, o_ref):
    # x_ref: (tile_n, D), w_ref: (out_features, D), b_ref: (out_features, 1)
    # o_ref: (out_features, tile_n)  -- lane-dense output block.
    acc = jax.lax.dot_general(
        w_ref[...],
        x_ref[...],
        dimension_numbers=(((1,), (1,)), ((), ())),  # contract both last axes
        preferred_element_type=jnp.float32,
    )
    o_ref[...] = (acc + b_ref[...]).astype(o_ref.dtype)


def linear_forward(x, weight, bias, *, block_bytes=4 << 20, fallback_bytes=1 << 20):
    """Forward pass of Model: y = x @ weight.T + bias.

    x:      (N, input_size) float32
    weight: (2, input_size) float32   (PyTorch nn.Linear convention)
    bias:   (2,)            float32
    returns (N, 2)          float32
    """
    n, d = x.shape
    out_features = weight.shape[0]
    itemsize = jnp.dtype(x.dtype).itemsize

    # Shape-gated fallback: below ~1 MiB of x, the pallas_call fixed overhead
    # dominates the us-scale work — let XLA fuse the matmul + bias instead.
    if n * d * itemsize < fallback_bytes or n < 128:
        return x @ weight.T + bias

    # Adaptive batch tile: ~block_bytes of x per grid step. The flipped output
    # block (out_features, tile_n) puts tile_n on the lane axis, so tile_n must
    # be a multiple of 128 (unless it spans the whole batch).
    tile_n = max(128, (block_bytes // (d * itemsize)) // 128 * 128)
    if tile_n >= n:
        tile_n = n
    grid = (pl.cdiv(n, tile_n),)

    # VMEM budget (double-buffered x + output, resident weight/bias, with 8/128
    # sublane/lane padding). Only raise the scoped-VMEM limit when the blocks
    # actually need it (keeps the default path safe on v5e's 16 MiB scoped VMEM
    # and v7x's 64 MiB physical VMEM).
    pad_out = max(out_features, 8)
    vmem_est = (2 * (tile_n * d * itemsize)            # x double buffer
                + 2 * (pad_out * tile_n * itemsize)    # output double buffer
                + 2 * (pad_out * d * itemsize)         # resident weight
                + 4096)                                # bias + slack
    cp_kwargs = dict(dimension_semantics=("parallel",))
    if vmem_est > (14 << 20):
        cp_kwargs["vmem_limit_bytes"] = int(min(vmem_est + (4 << 20), 56 << 20))

    b2d = bias.reshape(out_features, 1)

    out_t = pl.pallas_call(
        _linear_kernel,
        out_shape=jax.ShapeDtypeStruct((out_features, n), x.dtype),
        grid_spec=pl.GridSpec(
            grid=grid,
            in_specs=[
                # x: one ~4 MiB batch tile per grid step (double-buffered by Pallas).
                pl.BlockSpec((tile_n, d), lambda i: (i, 0)),
                # weight: lane-dense (out_features, D), resident across the grid.
                pl.BlockSpec((out_features, d), lambda i: (0, 0)),
                # bias: tiny resident tile.
                pl.BlockSpec((out_features, 1), lambda i: (0, 0)),
            ],
            out_specs=pl.BlockSpec((out_features, tile_n), lambda i: (0, i)),
        ),
        compiler_params=pltpu.CompilerParams(**cp_kwargs),
    )(x, weight, b2d)

    # (2, N) -> (N, 2): touches only 8*N bytes; XLA handles/fuses it cheaply.
    return out_t.T


if __name__ == "__main__":
    key = jax.random.PRNGKey(0)
    kx, kw, kb, kx2, kx3 = jax.random.split(key, 5)

    out_features = 2
    input_size = 128
    bound = 1.0 / jnp.sqrt(jnp.float32(input_size))
    weight = jax.random.uniform(
        kw, (out_features, input_size), jnp.float32, minval=-bound, maxval=bound
    )
    bias = jax.random.uniform(
        kb, (out_features,), jnp.float32, minval=-bound, maxval=bound
    )

    # --- Pallas path, evenly divisible batch: small block_bytes -> grid=(4,) to
    #     exercise the double-buffered pipeline while keeping the test small. ---
    batch = 2048  # 1 MiB of x -> above the XLA-fallback threshold
    x = jax.random.normal(kx, (batch, input_size), jnp.float32)
    y = linear_forward(x, weight, bias, block_bytes=256 << 10)
    jax.block_until_ready(y)
    y_ref = x @ weight.T + bias
    assert y.shape == (batch, out_features)
    assert jnp.allclose(y, y_ref, atol=1e-5, rtol=1e-5)

    # --- Pallas path, partial last block (batch not a multiple of tile_n). ---
    batch2 = 2200
    x2 = jax.random.normal(kx2, (batch2, input_size), jnp.float32)
    y2 = linear_forward(x2, weight, bias, block_bytes=256 << 10)
    jax.block_until_ready(y2)
    y2_ref = x2 @ weight.T + bias
    assert y2.shape == (batch2, out_features)
    assert jnp.allclose(y2, y2_ref, atol=1e-5, rtol=1e-5)

    # --- Small-shape fallback path (launch-overhead regime). ---
    small_d = 32
    small_n = 8
    x_small = jax.random.normal(kx3, (small_n, small_d), jnp.float32)
    w_small = weight[:, :small_d]
    y_small = linear_forward(x_small, w_small, bias)
    jax.block_until_ready(y_small)
    y_small_ref = x_small @ w_small.T + bias
    assert y_small.shape == (small_n, out_features)
    assert jnp.allclose(y_small, y_small_ref, atol=1e-5, rtol=1e-5)

    print("KERNEL_OK")
</pallas_src>

<mosaic_0001>
module attributes {stable_mosaic.version = 11 : i64} {
  func.func @_linear_kernel(%arg0: i32, %arg1: memref<512x128xf32, #tpu.memory_space<vmem>>, %arg2: memref<2x128xf32, #tpu.memory_space<vmem>>, %arg3: memref<2x1xf32, #tpu.memory_space<vmem>>, %arg4: memref<2x512xf32, #tpu.memory_space<vmem>>) attributes {dimension_semantics = [#tpu.dimension_semantics<parallel>], iteration_bounds = array<i64: 4>, scalar_prefetch = 0 : i64, scratch_operands = 0 : i64, tpu.core_type = #tpu.core_type<tc>, window_params = [{transform_indices = @transform_0, window_bounds = array<i64: 512, 128>}, {pipeline_mode = #tpu.pipeline_mode<synchronous>, transform_indices = @transform_1, window_bounds = array<i64: 2, 128>}, {pipeline_mode = #tpu.pipeline_mode<synchronous>, transform_indices = @transform_2, window_bounds = array<i64: 2, 1>}, {transform_indices = @transform_3, window_bounds = array<i64: 2, 512>}]} {
    %c0 = arith.constant 0 : index
    %c0_0 = arith.constant 0 : index
    %0 = vector.load %arg2[%c0, %c0_0] : memref<2x128xf32, #tpu.memory_space<vmem>>, vector<2x128xf32>
    %c0_1 = arith.constant 0 : index
    %c0_2 = arith.constant 0 : index
    %1 = vector.load %arg1[%c0_1, %c0_2] : memref<512x128xf32, #tpu.memory_space<vmem>>, vector<512x128xf32>
    %cst = arith.constant dense<0.000000e+00> : vector<2x512xf32>
    %2 = tpu.matmul %0, %1, %cst {dimension_numbers = #tpu.dot_dimension_numbers<[1], [1], [0], [0], [0, 0, 1, 0], [], []>} : vector<2x128xf32>, vector<512x128xf32>, vector<2x512xf32> -> vector<2x512xf32>
    %c0_3 = arith.constant 0 : index
    %c0_4 = arith.constant 0 : index
    %3 = vector.load %arg3[%c0_3, %c0_4] : memref<2x1xf32, #tpu.memory_space<vmem>>, vector<2x1xf32>
    %4 = vector.broadcast %3 : vector<2x1xf32> to vector<2x512xf32>
    %5 = arith.addf %2, %4 : vector<2x512xf32>
    %c0_5 = arith.constant 0 : index
    %c0_6 = arith.constant 0 : index
    %6 = vector.load %arg4[%c0_5, %c0_6] : memref<2x512xf32, #tpu.memory_space<vmem>>, vector<2x512xf32>
    tpu.vector_store %arg4[%c0_5, %c0_6], %5 {strides = array<i32>} : memref<2x512xf32, #tpu.memory_space<vmem>>, vector<2x512xf32>,
    return
  }
  func.func @transform_0(%arg0: i32) -> (i32, i32) {
    %c0_i32 = arith.constant 0 : i32
    %c0_i32_0 = arith.constant 0 : i32
    return %arg0, %c0_i32 : i32, i32
  }
  func.func @transform_1(%arg0: i32) -> (i32, i32) {
    %c0_i32 = arith.constant 0 : i32
    %c0_i32_0 = arith.constant 0 : i32
    %c0_i32_1 = arith.constant 0 : i32
    return %c0_i32, %c0_i32_0 : i32, i32
  }
  func.func @transform_2(%arg0: i32) -> (i32, i32) {
    %c0_i32 = arith.constant 0 : i32
    %c0_i32_0 = arith.constant 0 : i32
    %c0_i32_1 = arith.constant 0 : i32
    return %c0_i32, %c0_i32_0 : i32, i32
  }
  func.func @transform_3(%arg0: i32) -> (i32, i32) {
    %c0_i32 = arith.constant 0 : i32
    %c0_i32_0 = arith.constant 0 : i32
    return %c0_i32, %arg0 : i32, i32
  }
}

</mosaic_0001>

<llo_original>
// kernel: tpu_custom_call.1
$region0: #{tpu_custom_call.1}
  #allocation0 [shape = 'u32[]', space=smem, size = 0x4, offset = 0x4, fixed_abs, tag = 'smem constant byte address 0x4 - core index']
  #allocation1 [shape = 'u32[144,128]{1,0:T(1,128)}', space=vmem, size = 0x12000, scoped, tag = 'internal scratch']
  %s0 = inlined_call_operand.hbm [shape: f32[2048,128], index: 0, kind: input, shape index: {}]
  %s1 = inlined_call_operand.vmem [shape: f32[2,128], index: 1, kind: input, shape index: {}]
  %s2 = inlined_call_operand.vmem [shape: f32[2,1], index: 2, kind: input, shape index: {}]
  %s3 = inlined_call_operand.hbm [shape: f32[2,2048], index: 3, kind: output, shape index: {}]
  %s4 = sld [smem:[#allocation0]]
  $region49: #{tpu_custom_call.1} parent=0
    _
  %s6 = ssub.s32 1, %s4
  %s7 = scalar_select 0, %s6, %s4
  $region1: #{tpu_custom_call.1} parent=0
    #allocation2 [shape = 'u8[524288]{0}', space=vmem, size = 0x80000, scoped, tag = 'input window, operand 0']
    #allocation3 [shape = 's32[2]{0}', space=sflag, size = 0x8, scoped, tag = 'scoped memory for tpu_custom_call.1']
    #allocation4 [shape = 's32[2]{0}', space=sflag, size = 0x8, scoped, tag = 'scoped memory for tpu_custom_call.1']
    #allocation5 [shape = 'u8[8192]{0}', space=vmem, size = 0x2000, scoped, tag = 'output window, operand 0']
    %8 = vsyncpa [#allocation3], 0
    %s9 = scalar_lea.sflag [#allocation3], 1
    %10 = vsyncpa %s9, 0
    %11 = vsyncpa [#allocation4], 0
    %s12 = scalar_lea.sflag [#allocation4], 1
    %13 = vsyncpa %s12, 0
    loop: start=0, step=1, limit=6
    $region2: #{tpu_custom_call.1} parent=1 // loop_pre_header
      _
    $region3: #{tpu_custom_call.1} parent=1 // loop_header
      %s15 = sphi 0, %s19
      %p16 = scmp.ge.s32.totalorder %s15, 6
      %s25 = sphi 0, %s27
      %s28 = sphi 0, %s25
      %s29 = sphi 0, %s28
      %s45 = sphi 0, %s29
      %s49 = sphi 0, %s49
      %s51 = sphi 0, %s49
      %s52 = sphi 0, %s51
      %s66 = sphi 0, %s52
      %s70 = sphi 0, %s70
      %s72 = sphi 0, %s70
      %s73 = sphi 0, %s72
      %s87 = sphi 0, %s73
      %s93 = sphi 0, %s95
      %s96 = sphi 0, %s93
      %s97 = sphi 0, %s96
      %s113 = sphi 0, %s97
    $region4: #{tpu_custom_call.1} parent=1 // loop_header_branch
      %18 = sbr.rel (%p16) target = $region8
    $region5: #{tpu_custom_call.1} parent=1 // loop_body
      %s20 = ssub.s32 %s15, 1
      %s21 = ssub.s32 %s15, 2
      %s22 = sadd.s32 %s15, 1
      %s23 = ssub.s32 %s15, %s22
      %p24 = scmp.eq.s32.totalorder %s23, 0
      %s26 = sadd.s32 %s25, 1
      %s27 = scalar_select %p24, %s25, %s26
      %p30 = pneg %p24
      %p31 = scmp.eq.s32.totalorder %s15, 3
      %p32 = por %p30, %p31
      %p33 = scmp.ne.s32.totalorder %s25, %s28
      %p34 = scmp.eq.s32.totalorder %s15, 0
      %p35 = por %p33, %p34
      %p36 = scmp.ne.s32.totalorder %s25, %s28
      %p37 = scmp.eq.s32.totalorder %s20, 3
      %p38 = por %p36, %p37
      %p39 = scmp.ne.s32.totalorder %s28, %s29
      %p40 = scmp.eq.s32.totalorder %s20, 0
      %p41 = por %p39, %p40
      %p42 = scmp.ne.s32.totalorder %s28, %s29
      %p43 = scmp.eq.s32.totalorder %s21, 3
      %p44 = por %p42, %p43
      %p46 = scmp.ne.s32.totalorder %s29, %s45
      %p47 = scmp.eq.s32.totalorder %s21, 0
      %p48 = por %p46, %p47
      %s50 = sadd.s32 %s49, 1
      %p53 = scmp.eq.s32.totalorder %s15, 3
      %p54 = scmp.ne.s32.totalorder %s49, %s51
      %p55 = scmp.eq.s32.totalorder %s15, 0
      %p56 = por %p54, %p55
      %p57 = scmp.ne.s32.totalorder %s49, %s51
      %p58 = scmp.eq.s32.totalorder %s20, 3
      %p59 = por %p57, %p58
      %p60 = scmp.ne.s32.totalorder %s51, %s52
      %p61 = scmp.eq.s32.totalorder %s20, 0
      %p62 = por %p60, %p61
      %p63 = scmp.ne.s32.totalorder %s51, %s52
      %p64 = scmp.eq.s32.totalorder %s21, 3
      %p65 = por %p63, %p64
      %p67 = scmp.ne.s32.totalorder %s52, %s66
      %p68 = scmp.eq.s32.totalorder %s21, 0
      %p69 = por %p67, %p68
      %s71 = sadd.s32 %s70, 1
      %p74 = scmp.eq.s32.totalorder %s15, 3
      %p75 = scmp.ne.s32.totalorder %s70, %s72
      %p76 = scmp.eq.s32.totalorder %s15, 0
      %p77 = por %p75, %p76
      %p78 = scmp.ne.s32.totalorder %s70, %s72
      %p79 = scmp.eq.s32.totalorder %s20, 3
      %p80 = por %p78, %p79
      %p81 = scmp.ne.s32.totalorder %s72, %s73
      %p82 = scmp.eq.s32.totalorder %s20, 0
      %p83 = por %p81, %p82
      %p84 = scmp.ne.s32.totalorder %s72, %s73
      %p85 = scmp.eq.s32.totalorder %s21, 3
      %p86 = por %p84, %p85
      %p88 = scmp.ne.s32.totalorder %s73, %s87
      %p89 = scmp.eq.s32.totalorder %s21, 0
      %p90 = por %p88, %p89
      %s91 = ssub.s32 %s15, %s22
      %p92 = scmp.eq.s32.totalorder %s91, 0
      %s94 = sadd.s32 %s93, 1
      %s95 = scalar_select %p92, %s93, %s94
      %p98 = pneg %p92
      %p99 = scmp.eq.s32.totalorder %s15, 3
      %p100 = por %p98, %p99
      %p101 = scmp.ne.s32.totalorder %s93, %s96
      %p102 = scmp.eq.s32.totalorder %s15, 0
      %p103 = por %p101, %p102
      %p104 = scmp.ne.s32.totalorder %s93, %s96
      %p105 = scmp.eq.s32.totalorder %s20, 3
      %p106 = por %p104, %p105
      %p107 = scmp.ne.s32.totalorder %s96, %s97
      %p108 = scmp.eq.s32.totalorder %s20, 0
      %p109 = por %p107, %p108
      %p110 = scmp.ne.s32.totalorder %s96, %s97
      %p111 = scmp.eq.s32.totalorder %s21, 3
      %p112 = por %p110, %p111
      %p114 = scmp.ne.s32.totalorder %s97, %s113
      %p115 = scmp.eq.s32.totalorder %s21, 0
      %p116 = por %p114, %p115
      %p117 = scmp.le.s32.totalorder 1, %s15
      %p118 = scmp.lt.s32.totalorder %s15, 5
      %p119 = pnand %p117, %p118
      %p120 = pneg %p119
      // Predicated region
      $region9: #{tpu_custom_call.1} parent=5 // pred_check
        _
      $region10: #{tpu_custom_call.1} parent=5 // pred_check_branch
        %122 = sbr.rel (%p119) target = $region12
      $region11: #{tpu_custom_call.1} parent=5 // pred_region
        %s123 = ssub.s32 %s15, 1
        // Predicated region
        $region13: #{tpu_custom_call.1} parent=11 // pred_check
          %p124 = pneg %p62
        $region14: #{tpu_custom_call.1} parent=11 // pred_check_branch
          %126 = sbr.rel (%p124) target = $region16
        $region15: #{tpu_custom_call.1} parent=11 // pred_region
          _
        $region16: #{tpu_custom_call.1} parent=11 // pred_fallthru
          _
        // Predicated region
        $region17: #{tpu_custom_call.1} parent=11 // pred_check
          %p127 = pneg %p83
        $region18: #{tpu_custom_call.1} parent=11 // pred_check_branch
          %129 = sbr.rel (%p127) target = $region20
        $region19: #{tpu_custom_call.1} parent=11 // pred_region
          _
        $region20: #{tpu_custom_call.1} parent=11 // pred_fallthru
          _
      $region12: #{tpu_custom_call.1} parent=5 // pred_fallthru
        _
      %p130 = scmp.lt.s32.totalorder %s15, 4
      // Predicated region
      $region21: #{tpu_custom_call.1} parent=5 // pred_check
        %p131 = pneg %p130
      $region22: #{tpu_custom_call.1} parent=5 // pred_check_branch
        %133 = sbr.rel (%p131) target = $region24
      $region23: #{tpu_custom_call.1} parent=5 // pred_region
        // Predicated region
        $region25: #{tpu_custom_call.1} parent=23 // pred_check
          %p134 = pneg %p35
        $region26: #{tpu_custom_call.1} parent=23 // pred_check_branch
          %136 = sbr.rel (%p134) target = $region28
        $region27: #{tpu_custom_call.1} parent=23 // pred_region
          %s137 = sand.u32 %s25, 1
          %s138 = scalar_lea.sflag [#allocation3], %s137
          %s139 = sand.u32 %s25, 1
          %s140 = smul.addr %s139, 512
          %s141 = scalar_lea.vmem [#allocation2], %s140
          %s142 = smul.u32 64, %s15
          %s144 = ssub.s32 8192, 8192
          %145 = vsyncadd %s138, %s144
          %s146 = smul.addr %s142, 128
          %s147 = scalar_lea.hbm %s0, %s146
          %s148 = sshll.u32 %s141, 4
          %s149 = int_to_ptr.vmem [resolvable:$true] %s148
          %154 = dma.hbm_to_vmem [thread:$0]  %s147, 8192, %s149, %s138, 128, 128, 8
        $region28: #{tpu_custom_call.1} parent=23 // pred_fallthru
          _
      $region24: #{tpu_custom_call.1} parent=5 // pred_fallthru
        _
      %p155 = scmp.le.s32.totalorder 1, %s15
      %p156 = scmp.lt.s32.totalorder %s15, 5
      %p157 = pnand %p155, %p156
      %p158 = pneg %p157
      // Predicated region
      $region29: #{tpu_custom_call.1} parent=5 // pred_check
        _
      $region30: #{tpu_custom_call.1} parent=5 // pred_check_branch
        %160 = sbr.rel (%p157) target = $region32
      $region31: #{tpu_custom_call.1} parent=5 // pred_region
        %s161 = ssub.s32 %s15, 1
        %s162 = sand.u32 %s28, 1
        %s163 = scalar_lea.sflag [#allocation3], %s162
        %s164 = sand.u32 %s28, 1
        %s165 = smul.addr %s164, 512
        %s166 = scalar_lea.vmem [#allocation2], %s165
        // Predicated region
        $region33: #{tpu_custom_call.1} parent=31 // pred_check
          %p167 = pneg %p41
        $region34: #{tpu_custom_call.1} parent=31 // pred_check_branch
          %169 = sbr.rel (%p167) target = $region36
        $region35: #{tpu_custom_call.1} parent=31 // pred_region
          %170 = dma.done %s163, 8192
        $region36: #{tpu_custom_call.1} parent=31 // pred_fallthru
          _
        %s171 = sand.u32 %s28, 1
        %s172 = scalar_lea.sflag [#allocation3], %s171
        %s173 = sand.u32 %s28, 1
        %s174 = smul.addr %s173, 512
        %s175 = scalar_lea.vmem [#allocation2], %s174
        %p176 = pneg %p41
        %p177 = pneg %p38
        %p178 = pneg %p62
        %p179 = pneg %p59
        %p180 = pneg %p83
        %p181 = pneg %p80
        %p182 = pneg %p109
        %p183 = pneg %p106
        %s184 = sand.u32 %s96, 1
        %s185 = scalar_lea.sflag [#allocation4], %s184
        %s186 = sand.u32 %s96, 1
        %s187 = smul.addr %s186, 8
        %s188 = scalar_lea.vmem [#allocation5], %s187
        %s189 = smul.u32 64, %s20
        %s190 = smul.u32 4, %s20
        %v191 = vld [vmem:[%s1] sm:$0x3]
        %v192 = vld [vmem:[%s166] sm:$0xff]
        %v193 = vld [vmem:[%s166 + $0x8] sm:$0xff]
        %v194 = vld [vmem:[%s166 + $0x10] sm:$0xff]
        %v195 = vld [vmem:[%s166 + $0x18] sm:$0xff]
        %v196 = vld [vmem:[%s166 + $0x20] sm:$0xff]
        %v197 = vld [vmem:[%s166 + $0x28] sm:$0xff]
        %v198 = vld [vmem:[%s166 + $0x30] sm:$0xff]
        %v199 = vld [vmem:[%s166 + $0x38] sm:$0xff]
        %v200 = vld [vmem:[%s166 + $0x40] sm:$0xff]
        %v201 = vld [vmem:[%s166 + $0x48] sm:$0xff]
        %v202 = vld [vmem:[%s166 + $0x50] sm:$0xff]
        %v203 = vld [vmem:[%s166 + $0x58] sm:$0xff]
        %v204 = vld [vmem:[%s166 + $0x60] sm:$0xff]
        %v205 = vld [vmem:[%s166 + $0x68] sm:$0xff]
        %v206 = vld [vmem:[%s166 + $0x70] sm:$0xff]
        %v207 = vld [vmem:[%s166 + $0x78] sm:$0xff]
        %v208 = vld [vmem:[%s166 + $0x80] sm:$0xff]
        %v209 = vld [vmem:[%s166 + $0x88] sm:$0xff]
        %v210 = vld [vmem:[%s166 + $0x90] sm:$0xff]
        %v211 = vld [vmem:[%s166 + $0x98] sm:$0xff]
        %v212 = vld [vmem:[%s166 + $0xa0] sm:$0xff]
        %v213 = vld [vmem:[%s166 + $0xa8] sm:$0xff]
        %v214 = vld [vmem:[%s166 + $0xb0] sm:$0xff]
        %v215 = vld [vmem:[%s166 + $0xb8] sm:$0xff]
        %v216 = vld [vmem:[%s166 + $0xc0] sm:$0xff]
        %v217 = vld [vmem:[%s166 + $0xc8] sm:$0xff]
        %v218 = vld [vmem:[%s166 + $0xd0] sm:$0xff]
        %v219 = vld [vmem:[%s166 + $0xd8] sm:$0xff]
        %v220 = vld [vmem:[%s166 + $0xe0] sm:$0xff]
        %v221 = vld [vmem:[%s166 + $0xe8] sm:$0xff]
        %v222 = vld [vmem:[%s166 + $0xf0] sm:$0xff]
        %v223 = vld [vmem:[%s166 + $0xf8] sm:$0xff]
        %v224 = vld [vmem:[%s166 + $0x100] sm:$0xff]
        %v225 = vld [vmem:[%s166 + $0x108] sm:$0xff]
        %v226 = vld [vmem:[%s166 + $0x110] sm:$0xff]
        %v227 = vld [vmem:[%s166 + $0x118] sm:$0xff]
        %v228 = vld [vmem:[%s166 + $0x120] sm:$0xff]
        %v229 = vld [vmem:[%s166 + $0x128] sm:$0xff]
        %v230 = vld [vmem:[%s166 + $0x130] sm:$0xff]
        %v231 = vld [vmem:[%s166 + $0x138] sm:$0xff]
        %v232 = vld [vmem:[%s166 + $0x140] sm:$0xff]
        %v233 = vld [vmem:[%s166 + $0x148] sm:$0xff]
        %v234 = vld [vmem:[%s166 + $0x150] sm:$0xff]
        %v235 = vld [vmem:[%s166 + $0x158] sm:$0xff]
        %v236 = vld [vmem:[%s166 + $0x160] sm:$0xff]
        %v237 = vld [vmem:[%s166 + $0x168] sm:$0xff]
        %v238 = vld [vmem:[%s166 + $0x170] sm:$0xff]
        %v239 = vld [vmem:[%s166 + $0x178] sm:$0xff]
        %v240 = vld [vmem:[%s166 + $0x180] sm:$0xff]
        %v241 = vld [vmem:[%s166 + $0x188] sm:$0xff]
        %v242 = vld [vmem:[%s166 + $0x190] sm:$0xff]
        %v243 = vld [vmem:[%s166 + $0x198] sm:$0xff]
        %v244 = vld [vmem:[%s166 + $0x1a0] sm:$0xff]
        %v245 = vld [vmem:[%s166 + $0x1a8] sm:$0xff]
        %v246 = vld [vmem:[%s166 + $0x1b0] sm:$0xff]
        %v247 = vld [vmem:[%s166 + $0x1b8] sm:$0xff]
        %v248 = vld [vmem:[%s166 + $0x1c0] sm:$0xff]
        %v249 = vld [vmem:[%s166 + $0x1c8] sm:$0xff]
        %v250 = vld [vmem:[%s166 + $0x1d0] sm:$0xff]
        %v251 = vld [vmem:[%s166 + $0x1d8] sm:$0xff]
        %v252 = vld [vmem:[%s166 + $0x1e0] sm:$0xff]
        %v253 = vld [vmem:[%s166 + $0x1e8] sm:$0xff]
        %v254 = vld [vmem:[%s166 + $0x1f0] sm:$0xff]
        %v255 = vld [vmem:[%s166 + $0x1f8] sm:$0xff]
        %v256 = vld [vmem:[%s2] sm:$0x3]
        %258 = vset.pattern.permute.xlu0 0
        %259 = vperm.xlu0 %258, %v256
        %v260 = vpop.permute.xlu0 %259
        %262 = vmatprep.subr.mxu0 0.0
        %263 = vmatpush1.xpose.msra.mxu0 %v192
        %264 = vmatprep.subr.mxu0 0.0
        %265 = vmatpush1.xpose.msra.mxu0 %v193
        %266 = vmatprep.subr.mxu0 0.0
        %267 = vmatpush1.xpose.msra.mxu0 %v194
        %268 = vmatprep.subr.mxu0 0.0
        %269 = vmatpush1.xpose.msra.mxu0 %v195
        %270 = vmatprep.subr.mxu0 0.0
        %271 = vmatpush1.xpose.msra.mxu0 %v196
        %272 = vmatprep.subr.mxu0 0.0
        %273 = vmatpush1.xpose.msra.mxu0 %v197
        %274 = vmatprep.subr.mxu0 0.0
        %275 = vmatpush1.xpose.msra.mxu0 %v198
        %276 = vmatprep.subr.mxu0 0.0
        %277 = vmatpush1.xpose.msra.mxu0 %v199
        %278 = vmatprep.subr.mxu0 0.0
        %279 = vmatpush1.xpose.msra.mxu0 %v200
        %280 = vmatprep.subr.mxu0 0.0
        %281 = vmatpush1.xpose.msra.mxu0 %v201
        %282 = vmatprep.subr.mxu0 0.0
        %283 = vmatpush1.xpose.msra.mxu0 %v202
        %284 = vmatprep.subr.mxu0 0.0
        %285 = vmatpush1.xpose.msra.mxu0 %v203
        %286 = vmatprep.subr.mxu0 0.0
        %287 = vmatpush1.xpose.msra.mxu0 %v204
        %288 = vmatprep.subr.mxu0 0.0
        %289 = vmatpush1.xpose.msra.mxu0 %v205
        %290 = vmatprep.subr.mxu0 0.0
        %291 = vmatpush1.xpose.msra.mxu0 %v206
        %292 = vmatprep.subr.mxu0 0.0
        %293 = vmatpush1.xpose.msra.mxu0 %v207
        %294 = vmatprep.subr.mxu0 0.0
        %295 = vmatpush1.xpose.msra.mxu0 %v208
        %296 = vmatprep.subr.mxu0 0.0
        %297 = vmatpush1.xpose.msra.mxu0 %v209
        %298 = vmatprep.subr.mxu0 0.0
        %299 = vmatpush1.xpose.msra.mxu0 %v210
        %300 = vmatprep.subr.mxu0 0.0
        %301 = vmatpush1.xpose.msra.mxu0 %v211
        %302 = vmatprep.subr.mxu0 0.0
        %303 = vmatpush1.xpose.msra.mxu0 %v212
        %304 = vmatprep.subr.mxu0 0.0
        %305 = vmatpush1.xpose.msra.mxu0 %v213
        %306 = vmatprep.subr.mxu0 0.0
        %307 = vmatpush1.xpose.msra.mxu0 %v214
        %308 = vmatprep.subr.mxu0 0.0
        %309 = vmatpush1.xpose.msra.mxu0 %v215
        %310 = vmatprep.subr.mxu0 0.0
        %311 = vmatpush1.xpose.msra.mxu0 %v216
        %312 = vmatprep.subr.mxu0 0.0
        %313 = vmatpush1.xpose.msra.mxu0 %v217
        %314 = vmatprep.subr.mxu0 0.0
        %315 = vmatpush1.xpose.msra.mxu0 %v218
        %316 = vmatprep.subr.mxu0 0.0
        %317 = vmatpush1.xpose.msra.mxu0 %v219
        %318 = vmatprep.subr.mxu0 0.0
        %319 = vmatpush1.xpose.msra.mxu0 %v220
        %320 = vmatprep.subr.mxu0 0.0
        %321 = vmatpush1.xpose.msra.mxu0 %v221
        %322 = vmatprep.subr.mxu0 0.0
        %323 = vmatpush1.xpose.msra.mxu0 %v222
        %324 = vmatprep.subr.mxu0 0.0
        %325 = vmatpush1.xpose.msra.mxu0 %v223
        %326 = vmatprep.mubr.f32.mxu0 0.0
        %327 = vmatmul.mubr.f32.gmra.mrb[0].mxu0 %v191
        %v328 = vpop.f32.mrb[0].mxu0
        %v329 = vadd.f32 %v260, %v328
        %v330 = vpop.f32.mrb[0].mxu0
        %v331 = vadd.f32 %v260, %v330
        %332 = vdwg.mxu0
        %333 = vmatprep.subr.mxu0 0.0
        %334 = vmatpush1.xpose.msra.mxu0 %v224
        %335 = vmatprep.subr.mxu0 0.0
        %336 = vmatpush1.xpose.msra.mxu0 %v225
        %337 = vmatprep.subr.mxu0 0.0
        %338 = vmatpush1.xpose.msra.mxu0 %v226
        %339 = vmatprep.subr.mxu0 0.0
        %340 = vmatpush1.xpose.msra.mxu0 %v227
        %341 = vmatprep.subr.mxu0 0.0
        %342 = vmatpush1.xpose.msra.mxu0 %v228
        %343 = vmatprep.subr.mxu0 0.0
        %344 = vmatpush1.xpose.msra.mxu0 %v229
        %345 = vmatprep.subr.mxu0 0.0
        %346 = vmatpush1.xpose.msra.mxu0 %v230
        %347 = vmatprep.subr.mxu0 0.0
        %348 = vmatpush1.xpose.msra.mxu0 %v231
        %349 = vmatprep.subr.mxu0 0.0
        %350 = vmatpush1.xpose.msra.mxu0 %v232
        %351 = vmatprep.subr.mxu0 0.0
        %352 = vmatpush1.xpose.msra.mxu0 %v233
        %353 = vmatprep.subr.mxu0 0.0
        %354 = vmatpush1.xpose.msra.mxu0 %v234
        %355 = vmatprep.subr.mxu0 0.0
        %356 = vmatpush1.xpose.msra.mxu0 %v235
        %357 = vmatprep.subr.mxu0 0.0
        %358 = vmatpush1.xpose.msra.mxu0 %v236
        %359 = vmatprep.subr.mxu0 0.0
        %360 = vmatpush1.xpose.msra.mxu0 %v237
        %361 = vmatprep.subr.mxu0 0.0
        %362 = vmatpush1.xpose.msra.mxu0 %v238
        %363 = vmatprep.subr.mxu0 0.0
        %364 = vmatpush1.xpose.msra.mxu0 %v239
        %365 = vmatprep.subr.mxu0 0.0
        %366 = vmatpush1.xpose.msra.mxu0 %v240
        %367 = vmatprep.subr.mxu0 0.0
        %368 = vmatpush1.xpose.msra.mxu0 %v241
        %369 = vmatprep.subr.mxu0 0.0
        %370 = vmatpush1.xpose.msra.mxu0 %v242
        %371 = vmatprep.subr.mxu0 0.0
        %372 = vmatpush1.xpose.msra.mxu0 %v243
        %373 = vmatprep.subr.mxu0 0.0
        %374 = vmatpush1.xpose.msra.mxu0 %v244
        %375 = vmatprep.subr.mxu0 0.0
        %376 = vmatpush1.xpose.msra.mxu0 %v245
        %377 = vmatprep.subr.mxu0 0.0
        %378 = vmatpush1.xpose.msra.mxu0 %v246
        %379 = vmatprep.subr.mxu0 0.0
        %380 = vmatpush1.xpose.msra.mxu0 %v247
        %381 = vmatprep.subr.mxu0 0.0
        %382 = vmatpush1.xpose.msra.mxu0 %v248
        %383 = vmatprep.subr.mxu0 0.0
        %384 = vmatpush1.xpose.msra.mxu0 %v249
        %385 = vmatprep.subr.mxu0 0.0
        %386 = vmatpush1.xpose.msra.mxu0 %v250
        %387 = vmatprep.subr.mxu0 0.0
        %388 = vmatpush1.xpose.msra.mxu0 %v251
        %389 = vmatprep.subr.mxu0 0.0
        %390 = vmatpush1.xpose.msra.mxu0 %v252
        %391 = vmatprep.subr.mxu0 0.0
        %392 = vmatpush1.xpose.msra.mxu0 %v253
        %393 = vmatprep.subr.mxu0 0.0
        %394 = vmatpush1.xpose.msra.mxu0 %v254
        %395 = vmatprep.subr.mxu0 0.0
        %396 = vmatpush1.xpose.msra.mxu0 %v255
        %397 = vmatprep.mubr.f32.mxu0 0.0
        %398 = vmatmul.mubr.f32.gmra.mrb[0].mxu0 %v191
        %v399 = vpop.f32.mrb[0].mxu0
        %v400 = vadd.f32 %v260, %v399
        %v401 = vpop.f32.mrb[0].mxu0
        %v402 = vadd.f32 %v260, %v401
        %403 = vdwg.mxu0
        %v408 = vcombine.low %v329, %v331
        %v409 = vcombine.low %v400, %v402
        %v411 = vunpack.c.l.s4 1983009808
        %v412 = vunpack.c.0.s8 %v411
        %v413 = vlaneseq
        %v414 = vshrl.u32 %v413, 7
        %v415 = vsub.s32 %v412, %v414
        %v416 = vrot.slane %v408, %v415
        %v418 = vunpack.c.l.s4 1983009808
        %v419 = vunpack.c.0.s8 %v418
        %v420 = vlaneseq
        %v421 = vshrl.u32 %v420, 7
        %v422 = vsub.s32 %v419, %v421
        %v423 = vrot.slane %v409, %v422
        %v424 = vcombine.low %v416, %v423
        %426 = vst [vmem:[%s188] sm:$0xff] %v424
        %s427 = sand.u32 %s96, 1
        %s428 = scalar_lea.sflag [#allocation4], %s427
        %s429 = sand.u32 %s96, 1
        %s430 = smul.addr %s429, 8
        %s431 = scalar_lea.vmem [#allocation5], %s430
        // Predicated region
        $region37: #{tpu_custom_call.1} parent=31 // pred_check
          %p432 = pneg %p106
        $region38: #{tpu_custom_call.1} parent=31 // pred_check_branch
          %434 = sbr.rel (%p432) target = $region40
        $region39: #{tpu_custom_call.1} parent=31 // pred_region
          %s435 = smul.u32 4, %s20
          %s437 = ssub.s32 128, 128
          %438 = vsyncadd %s428, %s437
          %s439 = smul.addr %s435, 32
          %s440 = scalar_lea.hbm %s3, %s439
          %s442 = sshll.u32 %s431, 4
          %s443 = int_to_ptr.vmem [resolvable:$true] %s442
          %445 = dma.vmem_to_hbm [thread:$0]  %s443, 128, %s440, %s428
        $region40: #{tpu_custom_call.1} parent=31 // pred_fallthru
          _
      $region32: #{tpu_custom_call.1} parent=5 // pred_fallthru
        _
      %p446 = scmp.le.s32.totalorder 2, %s15
      // Predicated region
      $region41: #{tpu_custom_call.1} parent=5 // pred_check
        %p447 = pneg %p446
      $region42: #{tpu_custom_call.1} parent=5 // pred_check_branch
        %449 = sbr.rel (%p447) target = $region44
      $region43: #{tpu_custom_call.1} parent=5 // pred_region
        %s450 = ssub.s32 %s15, 2
        // Predicated region
        $region45: #{tpu_custom_call.1} parent=43 // pred_check
          %p451 = pneg %p112
        $region46: #{tpu_custom_call.1} parent=43 // pred_check_branch
          %453 = sbr.rel (%p451) target = $region48
        $region47: #{tpu_custom_call.1} parent=43 // pred_region
          %s454 = sand.u32 %s97, 1
          %s455 = scalar_lea.sflag [#allocation4], %s454
          %s456 = sand.u32 %s97, 1
          %s457 = smul.addr %s456, 8
          %s458 = scalar_lea.vmem [#allocation5], %s457
          %459 = dma.done %s455, 128
        $region48: #{tpu_custom_call.1} parent=43 // pred_fallthru
          _
      $region44: #{tpu_custom_call.1} parent=5 // pred_fallthru
        _
    $region6: #{tpu_custom_call.1} parent=1 // loop_footer
      %s19 = sadd.s32 1, %s15
    $region7: #{tpu_custom_call.1} parent=1 // loop_footer_branch
      %14 = sbr.rel target = $region3
    $region8: #{tpu_custom_call.1} parent=1 // loop_exit
      _
    %460 = vsyncpa [#allocation3], 1
    %s461 = scalar_lea.sflag [#allocation3], 1
    %462 = vsyncpa %s461, 1
    %463 = vsyncpa [#allocation4], 1
    %s464 = scalar_lea.sflag [#allocation4], 1
    %465 = vsyncpa %s464, 1

</llo_original>
